<compile_context>
chip_gen: v7x
topology: tpu7x:2x2x1
jax: 0.10.0
libtpu: 0.0.40
codegen_flags: <defaults>
</compile_context>

<pallas_src>
import functools
import numpy as np

import jax
import jax.numpy as jnp
from jax.experimental import pallas as pl
from jax.experimental.pallas import tpu as pltpu


LAYERS = ("e1a", "e1b", "e2a", "e2b", "bna", "bnb",
          "d2a", "d2b", "d1a", "d1b", "head")
IN_CH_PAD = 8           # first conv's Cin padded 5 -> 8 (sublane alignment)


def _layer_shapes(classes=3, base=16):
    c1, c2, c3 = base, 2 * base, 4 * base
    return {
        "e1a": (3, IN_CH_PAD, c1), "e1b": (3, c1, c1),
        "e2a": (3, c1, c2),        "e2b": (3, c2, c2),
        "bna": (3, c2, c3),        "bnb": (3, c3, c3),
        "d2a": (3, c3 + c2, c2),   "d2b": (3, c2, c2),
        "d1a": (3, c2 + c1, c1),   "d1b": (3, c1, c1),
        "head": (1, c1, classes),
    }


# ----------------------------------------------------------------------------
# Host-side constants (trace-time).  Built for the batch-folded lane layout
# p = b*H*W + y*W + x.
# ----------------------------------------------------------------------------
def _tap_masks(B, H, W):
    """masks[t, p] = 1 iff 3x3 tap t=(dy+1)*3+(dx+1) reads in-bounds at p."""
    M = np.zeros((9, H * W), np.float32)
    t = 0
    for dy in (-1, 0, 1):
        for dx in (-1, 0, 1):
            for y in range(H):
                for x in range(W):
                    if 0 <= y + dy < H and 0 <= x + dx < W:
                        M[t, y * W + x] = 1.0
            t += 1
    return jnp.asarray(np.tile(M, (1, B)), jnp.bfloat16)


def _pool_select_matrix(B, H, W):
    """S[p, q] = 1 iff folded pixel p is the top-left of 2x2 window q (block-diag over B)."""
    Ho, Wo = H // 2, W // 2
    S = np.zeros((B * H * W, B * Ho * Wo), np.float32)
    for b in range(B):
        for i in range(Ho):
            for j in range(Wo):
                S[b * H * W + (2 * i) * W + 2 * j,
                  b * Ho * Wo + i * Wo + j] = 1.0
    return jnp.asarray(S, jnp.bfloat16)


def _upsample_matrix(B, Ho, Wo):
    """U[q, p] = 1 iff low-res pixel q is the nearest source of hi-res p (block-diag over B)."""
    H, W = 2 * Ho, 2 * Wo
    U = np.zeros((B * Ho * Wo, B * H * W), np.float32)
    for b in range(B):
        for y in range(H):
            for x in range(W):
                U[b * Ho * Wo + (y // 2) * Wo + (x // 2),
                  b * H * W + y * W + x] = 1.0
    return jnp.asarray(U, jnp.bfloat16)


# ----------------------------------------------------------------------------
# One-off on-device probe of pltpu.roll's shift convention (review concern).
# jnp.roll convention: out[p] = x[(p - shift) mod n].
# ----------------------------------------------------------------------------
_ROLL_MATCHES_JNP = None


def _roll_matches_jnp():
    global _ROLL_MATCHES_JNP
    if _ROLL_MATCHES_JNP is None:
        def probe(x_ref, o_ref):
            o_ref[...] = pltpu.roll(x_ref[...], shift=1, axis=1)
        x = jnp.broadcast_to(jnp.arange(128, dtype=jnp.float32), (8, 128))
        y = pl.pallas_call(
            probe, out_shape=jax.ShapeDtypeStruct((8, 128), jnp.float32))(x)
        _ROLL_MATCHES_JNP = bool(np.asarray(y)[0, 0] == 127.0)
    return _ROLL_MATCHES_JNP


# ----------------------------------------------------------------------------
# Fused U-Net kernel.  Activations are (C, B*H*W); f32 between layers, bf16 on
# every MXU operand.
# ----------------------------------------------------------------------------
def _build_unet_kernel(B, H, W, couts, roll_like_jnp):
    W1, W2, W3 = W, W // 2, W // 4
    N1 = B * H * W
    N2 = B * (H // 2) * (W // 2)
    N3 = B * (H // 4) * (W // 4)

    def roll_lanes(x, delta, n):
        # out[:, p] = x[:, (p + delta) mod n]   (static shift -> XLU rotate)
        k = (-delta) % n if roll_like_jnp else delta % n
        if k == 0:
            return x
        return pltpu.roll(x, shift=k, axis=1)

    def conv3x3(x, w_ref, b, m_ref, w_img, n, relu=True):
        # x: (Cin, n); w_ref: (Cout, 9*Cin) bf16; b: (Cout, 1) f32; m_ref: (9, n) bf16
        xb = x.astype(jnp.bfloat16)          # taps built & concatenated in bf16
        mvals = m_ref[...]
        cols = []
        t = 0
        for dy in (-1, 0, 1):
            for dx in (-1, 0, 1):
                tap = roll_lanes(xb, dy * w_img + dx, n)
                if dy != 0 or dx != 0:
                    tap = tap * mvals[t:t + 1, :]        # zero the "same" halo
                cols.append(tap)
                t += 1
        col = jnp.concatenate(cols, axis=0)              # (9*Cin, n) bf16
        acc = jax.lax.dot_general(                       # single MXU pass, K=9*Cin
            w_ref[...], col, (((1,), (0,)), ((), ())),
            preferred_element_type=jnp.float32)          # (Cout, n) f32
        acc = acc + b                                    # f32 epilogue
        return jnp.maximum(acc, 0.0) if relu else acc

    def conv1x1(x, w_ref, b):
        acc = jax.lax.dot_general(
            w_ref[...], x.astype(jnp.bfloat16), (((1,), (0,)), ((), ())),
            preferred_element_type=jnp.float32)
        return acc + b

    def maxpool2x2(x, s_ref, w_img, n):
        m = jnp.maximum(
            jnp.maximum(x, roll_lanes(x, 1, n)),
            jnp.maximum(roll_lanes(x, w_img, n), roll_lanes(x, w_img + 1, n)))
        # down-select even (y, x) positions with an exact 0/1 bf16 matrix (MXU)
        return jax.lax.dot_general(
            m.astype(jnp.bfloat16), s_ref[...], (((1,), (0,)), ((), ())),
            preferred_element_type=jnp.float32)

    def upsample2x(x, u_ref):
        return jax.lax.dot_general(
            x.astype(jnp.bfloat16), u_ref[...], (((1,), (0,)), ((), ())),
            preferred_element_type=jnp.float32)

    def kernel(x_ref,
               e1a_w, e1b_w, e2a_w, e2b_w, bna_w, bnb_w,
               d2a_w, d2b_w, d1a_w, d1b_w, head_w,
               bias_ref,
               m1_ref, m2_ref, m3_ref, s1_ref, s2_ref, u2_ref, u1_ref,
               o_ref):

        def bias(i):
            return bias_ref[0:couts[i], i:i + 1]          # (Cout, 1) f32

        x = x_ref[...]                                    # (8, N1) bf16

        # encoder level 1
        e1 = conv3x3(x,  e1a_w, bias(0), m1_ref, W1, N1)
        e1 = conv3x3(e1, e1b_w, bias(1), m1_ref, W1, N1)
        p1 = maxpool2x2(e1, s1_ref, W1, N1)

        # encoder level 2
        e2 = conv3x3(p1, e2a_w, bias(2), m2_ref, W2, N2)
        e2 = conv3x3(e2, e2b_w, bias(3), m2_ref, W2, N2)
        p2 = maxpool2x2(e2, s2_ref, W2, N2)

        # bottleneck
        bn = conv3x3(p2, bna_w, bias(4), m3_ref, W3, N3)
        bn = conv3x3(bn, bnb_w, bias(5), m3_ref, W3, N3)

        # decoder level 2 (nearest 2x upsample + skip concat along channels)
        u2 = jnp.concatenate([upsample2x(bn, u2_ref), e2], axis=0)
        d2 = conv3x3(u2, d2a_w, bias(6), m2_ref, W2, N2)
        d2 = conv3x3(d2, d2b_w, bias(7), m2_ref, W2, N2)

        # decoder level 1
        u1 = jnp.concatenate([upsample2x(d2, u1_ref), e1], axis=0)
        d1 = conv3x3(u1, d1a_w, bias(8), m1_ref, W1, N1)
        d1 = conv3x3(d1, d1b_w, bias(9), m1_ref, W1, N1)

        # segmentation head: 1x1 conv to `classes`, no activation
        o_ref[...] = conv1x1(d1, head_w, bias(10)).astype(o_ref.dtype)

    return kernel


# ----------------------------------------------------------------------------
# Parameter init (He weights / PyTorch-style uniform bias), matmul-packed:
#   w: (Cout, kh*kw*Cin) bf16, b: (Cout,) f32.
# ----------------------------------------------------------------------------
def init_params(key, in_ch=5, classes=3, base=16):
    shapes = _layer_shapes(classes, base)
    keys = jax.random.split(key, 2 * len(LAYERS))
    params = {}
    for i, name in enumerate(LAYERS):
        ksz, cin, cout = shapes[name]
        real_cin = in_ch if name == "e1a" else cin
        fan_in = ksz * ksz * real_cin
        w = jax.random.normal(keys[2 * i], (ksz, ksz, cin, cout), jnp.float32)
        w = w * jnp.sqrt(2.0 / fan_in)
        if name == "e1a":
            w = w.at[:, :, in_ch:, :].set(0.0)            # padded channels = 0
        bound = 1.0 / np.sqrt(fan_in)
        b = jax.random.uniform(keys[2 * i + 1], (cout,), jnp.float32,
                               minval=-bound, maxval=bound)
        wmat = jnp.transpose(w, (3, 0, 1, 2)).reshape(cout, ksz * ksz * cin)
        params[name] = (wmat.astype(jnp.bfloat16), b)
    return params


# ----------------------------------------------------------------------------
# Forward pass: one fused pallas_call (no grid — everything is a single
# whole-array VMEM block).  NCHW in -> NCHW out.
# ----------------------------------------------------------------------------
def _forward_impl(images_nchw, params, roll_like_jnp):
    B, Cin, H, W = images_nchw.shape
    assert H % 4 == 0 and W % 4 == 0, "2-level U-Net needs H, W % 4 == 0"
    classes = params["head"][0].shape[0]
    couts = tuple(params[name][0].shape[0] for name in LAYERS)
    N1 = B * H * W

    # channel-pad 5 -> 8, fold batch into the lane axis, feed bf16
    x = jnp.pad(images_nchw, ((0, 0), (0, IN_CH_PAD - Cin), (0, 0), (0, 0)))
    x = jnp.transpose(x, (1, 0, 2, 3)).reshape(IN_CH_PAD, N1)
    x = x.astype(jnp.bfloat16)

    # pack all 11 biases into one (max_cout, n_layers) f32 operand
    bias_packed = jnp.zeros((max(couts), len(LAYERS)), jnp.float32)
    for i, name in enumerate(LAYERS):
        b = params[name][1]
        bias_packed = bias_packed.at[:b.shape[0], i].set(b)

    m1 = _tap_masks(B, H, W)
    m2 = _tap_masks(B, H // 2, W // 2)
    m3 = _tap_masks(B, H // 4, W // 4)
    s1 = _pool_select_matrix(B, H, W)
    s2 = _pool_select_matrix(B, H // 2, W // 2)
    u2 = _upsample_matrix(B, H // 4, W // 4)
    u1 = _upsample_matrix(B, H // 2, W // 2)

    weights = [params[name][0] for name in LAYERS]
    operands = [x] + weights + [bias_packed, m1, m2, m3, s1, s2, u2, u1]

    kernel = _build_unet_kernel(B, H, W, couts, roll_like_jnp)
    vmem_spec = pl.BlockSpec(memory_space=pltpu.MemorySpace.VMEM)

    out = pl.pallas_call(
        kernel,
        out_shape=jax.ShapeDtypeStruct((classes, N1), jnp.float32),
        in_specs=[vmem_spec] * len(operands),
        out_specs=vmem_spec,
    )(*operands)

    # (classes, B*H*W) -> (B, classes, H, W)
    return out.reshape(classes, B, H, W).transpose(1, 0, 2, 3)


_forward_jit = jax.jit(_forward_impl, static_argnums=2)


def custom_model_forward(images_nchw, params):
    return _forward_jit(images_nchw, params, _roll_matches_jnp())


# ----------------------------------------------------------------------------
# Pure-JAX (XLA) reference with the same bf16-rounded weights/input.
# ----------------------------------------------------------------------------
def _reference_forward(images_nchw, params):
    B, Cin, H, W = images_nchw.shape
    x = jnp.pad(images_nchw, ((0, 0), (0, IN_CH_PAD - Cin), (0, 0), (0, 0)))
    x = x.astype(jnp.bfloat16).astype(jnp.float32)

    def unpack(name):
        wmat, b = params[name]
        cout, k = wmat.shape
        ksz = 1 if name == "head" else 3
        cin = k // (ksz * ksz)
        w = wmat.astype(jnp.float32).reshape(cout, ksz, ksz, cin)
        return jnp.transpose(w, (1, 2, 3, 0)), b          # HWIO, (Cout,)

    def conv(x, name, relu=True):
        w, b = unpack(name)
        y = jax.lax.conv_general_dilated(
            x, w, (1, 1), "SAME",
            dimension_numbers=("NCHW", "HWIO", "NCHW"))
        y = y + b[None, :, None, None]
        return jnp.maximum(y, 0.0) if relu else y

    def pool(x):
        return jax.lax.reduce_window(
            x, -jnp.inf, jax.lax.max, (1, 1, 2, 2), (1, 1, 2, 2), "VALID")

    def up(x):
        return jnp.repeat(jnp.repeat(x, 2, axis=2), 2, axis=3)

    e1 = conv(conv(x, "e1a"), "e1b")
    e2 = conv(conv(pool(e1), "e2a"), "e2b")
    bn = conv(conv(pool(e2), "bna"), "bnb")
    d2 = conv(conv(jnp.concatenate([up(bn), e2], axis=1), "d2a"), "d2b")
    d1 = conv(conv(jnp.concatenate([up(d2), e1], axis=1), "d1a"), "d1b")
    return conv(d1, "head", relu=False)


if __name__ == "__main__":
    key = jax.random.PRNGKey(0)
    pkey, xkey = jax.random.split(key)

    # in_channels=5, classes=3 per the module spec; small spatial size.
    B, C_IN, H, W = 2, 5, 16, 16
    images = jax.random.normal(xkey, (B, C_IN, H, W), jnp.float32)
    params = init_params(pkey, in_ch=C_IN, classes=3, base=16)

    out = jax.block_until_ready(custom_model_forward(images, params))

    assert out.shape == (B, 3, H, W), out.shape
    assert out.dtype == jnp.float32
    assert bool(jnp.all(jnp.isfinite(out)))

    ref = jax.block_until_ready(_reference_forward(images, params))
    np.testing.assert_allclose(np.asarray(out), np.asarray(ref),
                               rtol=1e-1, atol=1e-1)
    print("KERNEL_OK")
</pallas_src>

<mosaic_0001>
module attributes {stable_mosaic.version = 11 : i64} {
  func.func @probe(%arg0: memref<8x128xf32, #tpu.memory_space<vmem>>, %arg1: memref<8x128xf32, #tpu.memory_space<vmem>>) attributes {dimension_semantics = [], scalar_prefetch = 0 : i64, scratch_operands = 0 : i64, tpu.core_type = #tpu.core_type<tc>} {
    %c0 = arith.constant 0 : index
    %c0_0 = arith.constant 0 : index
    %0 = vector.load %arg0[%c0, %c0_0] : memref<8x128xf32, #tpu.memory_space<vmem>>, vector<8x128xf32>
    %c1_i32 = arith.constant 1 : i32
    %1 = tpu.dynamic_rotate %0 by %c1_i32 dim 1 : vector<8x128xf32>, i32 -> vector<8x128xf32>
    %c0_1 = arith.constant 0 : index
    %c0_2 = arith.constant 0 : index
    %2 = vector.load %arg1[%c0_1, %c0_2] : memref<8x128xf32, #tpu.memory_space<vmem>>, vector<8x128xf32>
    tpu.vector_store %arg1[%c0_1, %c0_2], %1 {strides = array<i32>} : memref<8x128xf32, #tpu.memory_space<vmem>>, vector<8x128xf32>,
    return
  }
}

</mosaic_0001>

<llo_original>
// kernel: tpu_custom_call.1
$region0: #{tpu_custom_call.1}
  #allocation0 [shape = 'u32[]', space=smem, size = 0x4, offset = 0x4, fixed_abs, tag = 'smem constant byte address 0x4 - core index']
  #allocation1 [shape = 'u32[144,128]{1,0:T(1,128)}', space=vmem, size = 0x12000, scoped, tag = 'internal scratch']
  %s0 = inlined_call_operand.hbm [shape: f32[8,128], index: 0, kind: input, shape index: {}]
  %s1 = inlined_call_operand.hbm [shape: f32[8,128], index: 1, kind: output, shape index: {}]
  %s2 = sld [smem:[#allocation0]]
  $region18: #{tpu_custom_call.1} parent=0
    _
  %s4 = ssub.s32 1, %s2
  %s5 = scalar_select 0, %s4, %s2
  $region1: #{tpu_custom_call.1} parent=0
    #allocation2 [shape = 'u8[4096]{0}', space=vmem, size = 0x1000, scoped, tag = 'input window, operand 0, single buffered']
    #allocation3 [shape = 's32[1]{0}', space=sflag, size = 0x4, scoped, tag = 'scoped memory for tpu_custom_call.1']
    #allocation4 [shape = 's32[1]{0}', space=sflag, size = 0x4, scoped, tag = 'scoped memory for tpu_custom_call.1']
    #allocation5 [shape = 'u8[4096]{0}', space=vmem, size = 0x1000, scoped, tag = 'output window, operand 0, single buffered']
    %6 = vsyncpa [#allocation3], 0
    %7 = vsyncpa [#allocation4], 0
    // Predicated region
    $region2: #{tpu_custom_call.1} parent=1 // pred_check
      _
    $region3: #{tpu_custom_call.1} parent=1 // pred_check_branch
      %9 = sbr.rel (0) target = $region5
    $region4: #{tpu_custom_call.1} parent=1 // pred_region
      %s11 = ssub.s32 128, 128
      %12 = vsyncadd [#allocation3], %s11
      %s14 = sshll.u32 [#allocation2], 4
      %s15 = int_to_ptr.vmem [resolvable:$true] %s14
      %17 = dma.hbm_to_vmem [thread:$0]  %s0, 128, %s15, [#allocation3]
    $region5: #{tpu_custom_call.1} parent=1 // pred_fallthru
      _
    // Predicated region
    $region6: #{tpu_custom_call.1} parent=1 // pred_check
      _
    $region7: #{tpu_custom_call.1} parent=1 // pred_check_branch
      %19 = sbr.rel (0) target = $region9
    $region8: #{tpu_custom_call.1} parent=1 // pred_region
      %20 = dma.done [#allocation3], 128
    $region9: #{tpu_custom_call.1} parent=1 // pred_fallthru
      _
    %v21 = vld [vmem:[#allocation2] sm:$0xff]
    %22 = vrot.lane.b32.xlu0 %v21, 1
    %v23 = vpop.permute.xlu0 %22
    %24 = vst [vmem:[#allocation5] sm:$0xff] %v23
    // Predicated region
    $region10: #{tpu_custom_call.1} parent=1 // pred_check
      _
    $region11: #{tpu_custom_call.1} parent=1 // pred_check_branch
      %26 = sbr.rel (0) target = $region13
    $region12: #{tpu_custom_call.1} parent=1 // pred_region
      %s28 = ssub.s32 128, 128
      %29 = vsyncadd [#allocation4], %s28
      %s31 = sshll.u32 [#allocation5], 4
      %s32 = int_to_ptr.vmem [resolvable:$true] %s31
      %34 = dma.vmem_to_hbm [thread:$0]  %s32, 128, %s1, [#allocation4]
    $region13: #{tpu_custom_call.1} parent=1 // pred_fallthru
      _
    // Predicated region
    $region14: #{tpu_custom_call.1} parent=1 // pred_check
      _
    $region15: #{tpu_custom_call.1} parent=1 // pred_check_branch
      %36 = sbr.rel (0) target = $region17
    $region16: #{tpu_custom_call.1} parent=1 // pred_region
      %37 = dma.done [#allocation4], 128
    $region17: #{tpu_custom_call.1} parent=1 // pred_fallthru
      _
    %38 = vsyncpa [#allocation3], 1
    %39 = vsyncpa [#allocation4], 1

</llo_original>
